<compile_context>
chip_gen: v7x
topology: tpu7x:2x2x1
jax: 0.10.0
libtpu: 0.0.40
codegen_flags: <defaults>
</compile_context>

<pallas_src>
import functools
import math

import numpy as np
import jax
import jax.numpy as jnp
from jax.experimental import pallas as pl
from jax.experimental.pallas import tpu as pltpu


_LANE = 128
_MAX_TILE_LANES = 4096   # (KK * 4096 * 4 B) * 2 buffers << VMEM on v5e/v6e/v7x


def _quadratic_kernel(coef_ref, m_ref, out_ref):
    """out[k, t] = c00[k]*m00[t] + cxy[k]*m01[t] + c11[k]*m11[t]

    coef_ref : (KK, 3) f32  columns = [-p0^2, -2*p0*p1, -p1^2] (negation folded)
    m_ref    : (3, T)  f32  rows    = [m00, m01, m11] of the 2x2 inverse cov
    out_ref  : (KK, T) f32  lane-dense output slab
    """
    c00 = coef_ref[:, 0:1]            # (KK, 1)
    cxy = coef_ref[:, 1:2]            # (KK, 1)
    c11 = coef_ref[:, 2:3]            # (KK, 1)
    m00 = m_ref[0:1, :]               # (1, T)
    m01 = m_ref[1:2, :]               # (1, T)
    m11 = m_ref[2:3, :]               # (1, T)
    # Outer-product style broadcasts (KK,1)*(1,T) -> (KK,T); one dense store.
    out_ref[...] = c00 * m00 + cxy * m01 + c11 * m11


def _choose_tile(oi: int) -> tuple[int, int]:
    """Pick the lane tile (multiple of 128) and the padded O*I extent."""
    oi_lanes = ((oi + _LANE - 1) // _LANE) * _LANE
    if oi_lanes <= _LANE:
        tile = _LANE
    elif oi_lanes <= 2 * _MAX_TILE_LANES:
        # Aim for >= 2 grid steps when there is enough work (v7x has 2 TCs).
        half = (oi_lanes + 1) // 2
        tile = min(((half + _LANE - 1) // _LANE) * _LANE, _MAX_TILE_LANES)
    else:
        tile = _MAX_TILE_LANES
    oi_pad = ((oi + tile - 1) // tile) * tile
    return tile, oi_pad


def make_pos_grid(kernel_size: int) -> jnp.ndarray:
    """Centered integer tap coordinates, shape (K*K, 2)."""
    k = kernel_size
    coords = jnp.arange(k, dtype=jnp.float32) - (k - 1) / 2.0
    yy, xx = jnp.meshgrid(coords, coords, indexing="ij")
    return jnp.stack([yy.reshape(-1), xx.reshape(-1)], axis=-1)


def _tap_coefficients(kernel_size: int) -> np.ndarray:
    """Static (K*K, 3) coefficients [-p0^2, -2*p0*p1, -p1^2], negation folded."""
    k = kernel_size
    coords = np.arange(k, dtype=np.float32) - (k - 1) / 2.0
    yy, xx = np.meshgrid(coords, coords, indexing="ij")
    p0 = yy.reshape(-1)
    p1 = xx.reshape(-1)
    return np.stack([-(p0 * p0), -(2.0 * p0 * p1), -(p1 * p1)],
                    axis=1).astype(np.float32)


@functools.partial(jax.jit, static_argnums=(2,))
def quadratic_kernel_spectral_2d(log_std: jnp.ndarray,
                                 theta: jnp.ndarray,
                                 kernel_size: int) -> jnp.ndarray:
    """Forward pass of QuadraticKernelSpectral2D. Returns OIHW (O, I, K, K)."""
    O, I, _ = log_std.shape
    K = kernel_size
    KK = K * K
    OI = O * I
    TILE, OI_pad = _choose_tile(OI)

    # Fold the transcendentals into the symmetric inverse-covariance entries in
    # XLA (3 floats per (o,i) -- same traffic as log_std+theta); the Pallas
    # kernel is then pure FMAs on lane-dense data.
    ls = log_std.astype(jnp.float32).reshape(OI, 2)
    th = theta.astype(jnp.float32).reshape(OI)
    e0 = jnp.exp(-2.0 * ls[:, 0])
    e1 = jnp.exp(-2.0 * ls[:, 1])
    c = jnp.cos(th)
    s = jnp.sin(th)
    m = jnp.stack([c * c * e0 + s * s * e1,      # m00
                   c * s * (e0 - e1),            # m01
                   s * s * e0 + c * c * e1],     # m11
                  axis=0)                        # (3, OI)
    m = jnp.pad(m, ((0, 0), (0, OI_pad - OI)))   # pad only the tiny input

    coef = jnp.asarray(_tap_coefficients(K))     # (KK, 3), static constants

    grid = (OI_pad // TILE,)
    out = pl.pallas_call(
        _quadratic_kernel,
        out_shape=jax.ShapeDtypeStruct((KK, OI_pad), jnp.float32),
        grid=grid,
        in_specs=[
            pl.BlockSpec((KK, 3), lambda i: (0, 0)),      # resident across steps
            pl.BlockSpec((3, TILE), lambda i: (0, i)),    # m rows, lane-tiled
        ],
        out_specs=pl.BlockSpec((KK, TILE), lambda i: (0, i)),
        compiler_params=pltpu.CompilerParams(
            dimension_semantics=("parallel",)),
    )(coef, m)

    # Layout plumbing back to OIHW; the lane-pad slice fuses with the transpose.
    return out[:, :OI].T.reshape(O, I, K, K)


def _reference(log_std, theta, kernel_size):
    """Pure-JAX reference of the PyTorch forward for verification."""
    O, I, _ = log_std.shape
    K = kernel_size
    pos = make_pos_grid(K)                                    # (KK, 2)
    e = jnp.exp(-2.0 * log_std)                               # (O, I, 2)
    c, s = jnp.cos(theta), jnp.sin(theta)                     # (O, I)
    R = jnp.stack([jnp.stack([c, -s], -1),
                   jnp.stack([s, c], -1)], -2)                # (O, I, 2, 2)
    inv_cov = jnp.einsum("oiab,oib,oicb->oiac", R, e, R)      # R diag(e) R^T
    dists = jnp.einsum("kx,oixX,kX->oik", pos, inv_cov, pos)
    return -dists.reshape(O, I, K, K)


if __name__ == "__main__":
    def make_params(key, out_channels, in_channels):
        k_var, k_perm = jax.random.split(key)
        # "skewed"-style variances: axis 0 modest, axis 1 larger.
        var = jax.random.uniform(k_var, (out_channels, in_channels, 2),
                                 minval=1.0, maxval=3.0)
        var = var.at[..., 1].multiply(4.0)
        log_std = 0.5 * jnp.log(var)
        # "spin"-style thetas: evenly spaced angles, shuffled deterministically.
        n = out_channels * in_channels
        spin = jnp.linspace(0.0, 2.0 * math.pi, n, endpoint=False)
        theta = jax.random.permutation(k_perm, spin).reshape(out_channels,
                                                             in_channels)
        return log_std, theta

    key = jax.random.PRNGKey(0)
    k1, k2 = jax.random.split(key)

    # Docstring example: QuadraticKernelSpectral2D(5, 6, 3) -> (6, 5, 3, 3)
    in_channels, out_channels, kernel_size = 5, 6, 3
    log_std, theta = make_params(k1, out_channels, in_channels)
    out = jax.block_until_ready(
        quadratic_kernel_spectral_2d(log_std, theta, kernel_size))
    ref = _reference(log_std, theta, kernel_size)
    assert out.shape == (out_channels, in_channels, kernel_size, kernel_size)
    assert jnp.allclose(out, ref, atol=1e-5, rtol=1e-5)

    # Second small case exercising a multi-step grid + lane padding (O*I = 320).
    log_std2, theta2 = make_params(k2, 8, 40)
    out2 = jax.block_until_ready(quadratic_kernel_spectral_2d(log_std2, theta2, 5))
    ref2 = _reference(log_std2, theta2, 5)
    assert out2.shape == (8, 40, 5, 5)
    assert jnp.allclose(out2, ref2, atol=1e-5, rtol=1e-5)

    print("KERNEL_OK")
</pallas_src>

<mosaic_0001>
module attributes {stable_mosaic.version = 11 : i64} {
  func.func @_quadratic_kernel(%arg0: i32, %arg1: memref<9x3xf32, #tpu.memory_space<vmem>>, %arg2: memref<3x128xf32, #tpu.memory_space<vmem>>, %arg3: memref<9x128xf32, #tpu.memory_space<vmem>>) attributes {dimension_semantics = [#tpu.dimension_semantics<parallel>], iteration_bounds = array<i64: 1>, scalar_prefetch = 0 : i64, scratch_operands = 0 : i64, tpu.core_type = #tpu.core_type<tc>, window_params = [{pipeline_mode = #tpu.pipeline_mode<synchronous>, transform_indices = @transform_0, window_bounds = array<i64: 9, 3>}, {transform_indices = @transform_1, window_bounds = array<i64: 3, 128>}, {transform_indices = @transform_2, window_bounds = array<i64: 9, 128>}]} {
    %c0 = arith.constant 0 : index
    %c0_0 = arith.constant 0 : index
    %0 = vector.load %arg1[%c0, %c0_0] : memref<9x3xf32, #tpu.memory_space<vmem>>, vector<9x1xf32>
    %c0_1 = arith.constant 0 : index
    %c1 = arith.constant 1 : index
    %1 = vector.load %arg1[%c0_1, %c1] : memref<9x3xf32, #tpu.memory_space<vmem>>, vector<9x1xf32>
    %c0_2 = arith.constant 0 : index
    %c2 = arith.constant 2 : index
    %2 = vector.load %arg1[%c0_2, %c2] : memref<9x3xf32, #tpu.memory_space<vmem>>, vector<9x1xf32>
    %c0_3 = arith.constant 0 : index
    %c0_4 = arith.constant 0 : index
    %3 = vector.load %arg2[%c0_3, %c0_4] : memref<3x128xf32, #tpu.memory_space<vmem>>, vector<1x128xf32>
    %c1_5 = arith.constant 1 : index
    %c0_6 = arith.constant 0 : index
    %4 = vector.load %arg2[%c1_5, %c0_6] : memref<3x128xf32, #tpu.memory_space<vmem>>, vector<1x128xf32>
    %c2_7 = arith.constant 2 : index
    %c0_8 = arith.constant 0 : index
    %5 = vector.load %arg2[%c2_7, %c0_8] : memref<3x128xf32, #tpu.memory_space<vmem>>, vector<1x128xf32>
    %6 = vector.broadcast %0 : vector<9x1xf32> to vector<9x128xf32>
    %7 = vector.broadcast %3 : vector<1x128xf32> to vector<9x128xf32>
    %8 = arith.mulf %6, %7 : vector<9x128xf32>
    %9 = vector.broadcast %1 : vector<9x1xf32> to vector<9x128xf32>
    %10 = vector.broadcast %4 : vector<1x128xf32> to vector<9x128xf32>
    %11 = arith.mulf %9, %10 : vector<9x128xf32>
    %12 = arith.addf %8, %11 : vector<9x128xf32>
    %13 = vector.broadcast %2 : vector<9x1xf32> to vector<9x128xf32>
    %14 = vector.broadcast %5 : vector<1x128xf32> to vector<9x128xf32>
    %15 = arith.mulf %13, %14 : vector<9x128xf32>
    %16 = arith.addf %12, %15 : vector<9x128xf32>
    %c0_9 = arith.constant 0 : index
    %c0_10 = arith.constant 0 : index
    %17 = vector.load %arg3[%c0_9, %c0_10] : memref<9x128xf32, #tpu.memory_space<vmem>>, vector<9x128xf32>
    tpu.vector_store %arg3[%c0_9, %c0_10], %16 {strides = array<i32>} : memref<9x128xf32, #tpu.memory_space<vmem>>, vector<9x128xf32>,
    return
  }
  func.func @transform_0(%arg0: i32) -> (i32, i32) {
    %c0_i32 = arith.constant 0 : i32
    %c0_i32_0 = arith.constant 0 : i32
    %c0_i32_1 = arith.constant 0 : i32
    return %c0_i32, %c0_i32_0 : i32, i32
  }
  func.func @transform_1(%arg0: i32) -> (i32, i32) {
    %c0_i32 = arith.constant 0 : i32
    %c0_i32_0 = arith.constant 0 : i32
    return %c0_i32, %arg0 : i32, i32
  }
  func.func @transform_2(%arg0: i32) -> (i32, i32) {
    %c0_i32 = arith.constant 0 : i32
    %c0_i32_0 = arith.constant 0 : i32
    return %c0_i32, %arg0 : i32, i32
  }
}

</mosaic_0001>

<llo_original>
// kernel: quadratic_kernel_spectral_2d.1
$region0: #{quadratic_kernel_spectral_2d.1}
  #allocation0 [shape = 'u32[]', space=smem, size = 0x4, offset = 0x4, fixed_abs, tag = 'smem constant byte address 0x4 - core index']
  #allocation1 [shape = 'u32[144,128]{1,0:T(1,128)}', space=vmem, size = 0x12000, scoped, tag = 'internal scratch']
  %s0 = inlined_call_operand.vmem [shape: f32[9,3], index: 0, kind: input, shape index: {}]
  %s1 = inlined_call_operand.vmem [shape: f32[3,128], index: 1, kind: input, shape index: {}]
  %s2 = inlined_call_operand.vmem [shape: f32[9,128], index: 2, kind: output, shape index: {}]
  %s3 = sld [smem:[#allocation0]]
  $region18: #{quadratic_kernel_spectral_2d.1} parent=0
    _
  %s5 = ssub.s32 1, %s3
  %s6 = scalar_select 0, %s5, %s3
  // Predicated region
  $region2: #{quadratic_kernel_spectral_2d.1} parent=0 // pred_check
    _
  $region3: #{quadratic_kernel_spectral_2d.1} parent=0 // pred_check_branch
    %8 = sbr.rel (0) target = $region5
  $region4: #{quadratic_kernel_spectral_2d.1} parent=0 // pred_region
    _
  $region5: #{quadratic_kernel_spectral_2d.1} parent=0 // pred_fallthru
    _
  // Predicated region
  $region6: #{quadratic_kernel_spectral_2d.1} parent=0 // pred_check
    _
  $region7: #{quadratic_kernel_spectral_2d.1} parent=0 // pred_check_branch
    %10 = sbr.rel (0) target = $region9
  $region8: #{quadratic_kernel_spectral_2d.1} parent=0 // pred_region
    _
  $region9: #{quadratic_kernel_spectral_2d.1} parent=0 // pred_fallthru
    _
  %v11 = vld [vmem:[%s0] sm:$0xff]
  %v12 = vld [vmem:[%s0 + $0x8] sm:$0x1]
  %v13 = vld [vmem:[%s1] sm:$0x1]
  %v14 = vld [vmem:[%s1 + $0x1] sm:$0x1]
  %v15 = vld [vmem:[%s1 + $0x2] sm:$0x1]
  %17 = vset.pattern.permute.xlu0 0
  %18 = vperm.xlu0 %17, %v11
  %v19 = vpop.permute.xlu0 %18
  %22 = vset.pattern.permute.xlu0 0
  %23 = vperm.xlu0 %22, %v12
  %v24 = vpop.permute.xlu0 %23
  %v26 = vlaneseq
  %v27 = vshrl.u32 %v26, 7
  %v28 = vsub.s32 0, %v27
  %v29 = vrot.slane %v13, %v28
  %v30 = vmul.f32 %v19, %v29
  %v31 = vmul.f32 %v24, %v29
  %32 = vset.pattern.permute.xlu0 1
  %33 = vperm.xlu0 %32, %v11
  %v34 = vpop.permute.xlu0 %33
  %36 = vset.pattern.permute.xlu0 1
  %37 = vperm.xlu0 %36, %v12
  %v38 = vpop.permute.xlu0 %37
  %v40 = vlaneseq
  %v41 = vshrl.u32 %v40, 7
  %v42 = vsub.s32 0, %v41
  %v43 = vrot.slane %v14, %v42
  %v44 = vmul.f32 %v34, %v43
  %v45 = vmul.f32 %v38, %v43
  %v46 = vadd.f32 %v30, %v44
  %v47 = vadd.f32 %v31, %v45
  %48 = vset.pattern.permute.xlu0 2
  %49 = vperm.xlu0 %48, %v11
  %v50 = vpop.permute.xlu0 %49
  %52 = vset.pattern.permute.xlu0 2
  %53 = vperm.xlu0 %52, %v12
  %v54 = vpop.permute.xlu0 %53
  %v56 = vlaneseq
  %v57 = vshrl.u32 %v56, 7
  %v58 = vsub.s32 0, %v57
  %v59 = vrot.slane %v15, %v58
  %v60 = vmul.f32 %v50, %v59
  %v61 = vmul.f32 %v54, %v59
  %v62 = vadd.f32 %v46, %v60
  %v63 = vadd.f32 %v47, %v61
  %64 = vst [vmem:[%s2] sm:$0xff] %v62
  %65 = vst [vmem:[%s2 + $0x8] sm:$0x1] %v63
  // Predicated region
  $region10: #{quadratic_kernel_spectral_2d.1} parent=0 // pred_check
    _
  $region11: #{quadratic_kernel_spectral_2d.1} parent=0 // pred_check_branch
    %67 = sbr.rel (0) target = $region13
  $region12: #{quadratic_kernel_spectral_2d.1} parent=0 // pred_region
    _
  $region13: #{quadratic_kernel_spectral_2d.1} parent=0 // pred_fallthru
    _
  // Predicated region
  $region14: #{quadratic_kernel_spectral_2d.1} parent=0 // pred_check
    _
  $region15: #{quadratic_kernel_spectral_2d.1} parent=0 // pred_check_branch
    %69 = sbr.rel (0) target = $region17
  $region16: #{quadratic_kernel_spectral_2d.1} parent=0 // pred_region
    _
  $region17: #{quadratic_kernel_spectral_2d.1} parent=0 // pred_fallthru
    _

</llo_original>
